<compile_context>
chip_gen: v6e
topology: v6e:2x2x1
jax: 0.10.0
libtpu: 0.0.40
codegen_flags: <defaults>
</compile_context>

<pallas_src>
import jax
import jax.numpy as jnp
from jax.experimental import pallas as pl
from jax.experimental.pallas import tpu as pltpu


def _fused_rnn_kernel(coeff_ref, x_ref, *refs):
    """Fused ChebyNetcell stack for one (bt_tile, N, D_in) activation tile.

    refs = (w_0, b_0, w_1, b_1, ..., o_ref); w_l is (D_l, 4*dim_out) in the matmul
    dtype, b_l is (1, dim_out) f32.  coeff_ref is the resident (3, N, 1) table of
    per-node Chebyshev coefficients [d, 2d^2-1, 4d^3-3d] with d = diag(L).
    """
    o_ref = refs[-1]
    wb_refs = refs[:-1]
    num_layers = len(wb_refs) // 2

    cc = coeff_ref[...]                     # (3, N, 1) f32, resident
    c0 = cc[0:1]                            # (1, N, 1)  == d
    c1 = cc[1:2]                            # (1, N, 1)  == 2d^2 - 1
    c2 = cc[2:3]                            # (1, N, 1)  == 4d^3 - 3d

    h = x_ref[...]                          # (bt_tile, N, D_in), matmul dtype
    for layer in range(num_layers):
        w = wb_refs[2 * layer][...]         # (D_l, 4*do), matmul dtype
        b = wb_refs[2 * layer + 1][...]     # (1, do) f32
        bt, n, dl = h.shape
        do = w.shape[1] // 4
        # One lane-dense MXU matmul (4*do = 128 output lanes), f32 accumulate.
        p = jnp.dot(h.reshape(bt * n, dl).astype(w.dtype), w,
                    preferred_element_type=jnp.float32).reshape(bt, n, 4 * do)
        # VPU combine of the 4 chunks with per-node coefficients + bias + ReLU.
        # (The duplicated edge-type block is pre-folded into W0+W1 in the wrapper.)
        out = (c0 * p[..., 0:do] + c1 * p[..., do:2 * do]
               + c2 * p[..., 2 * do:3 * do] + p[..., 3 * do:4 * do]) + b[None]
        h = jnp.maximum(out, 0.0)           # stays f32 between layers
    o_ref[...] = h.astype(o_ref.dtype)


def _pick_bt_tile(bt_total, num_nodes, target_rows=1024):
    """Largest divisor of bt_total giving ~target_rows rows per tile while keeping
    >=2 grid steps when possible (so v7x's second TensorCore gets work)."""
    cap = max(1, target_rows // max(num_nodes, 1))
    if bt_total >= 2:
        cap = min(cap, bt_total // 2)
    best = 1
    for t in range(1, bt_total + 1):
        if bt_total % t == 0 and t <= cap:
            best = t
    return best


def rnn_forward(x, L, params, *, bt_tile=None, matmul_dtype=jnp.bfloat16):
    """x: (B, T, N, D_in) f32; L: (N, N) f32; params: [(w: (5*D_l, dim_out), b: (1, dim_out))]."""
    B, T, N, D_in = x.shape
    BT = B * T
    dim_out = params[-1][0].shape[1]

    if bt_tile is None:
        bt_tile = _pick_bt_tile(BT, N)
    assert BT % bt_tile == 0
    grid = (BT // bt_tile,)

    # Per-node Chebyshev coefficients of diag(L): T1 = d, T2 = 2d^2-1, T3 = 4d^3-3d.
    d = jnp.diagonal(L).astype(jnp.float32)
    c1 = 2.0 * d * d - 1.0
    c2 = 2.0 * d * c1 - d
    coeff = jnp.stack([d, c1, c2], axis=0).reshape(3, N, 1)

    # Fold the duplicated edge-type block into the weight and pre-concatenate along
    # the OUTPUT axis: msg @ W == d*(x@(W0+W1)) + T2*(x@W2) + T3*(x@W3) + x@W4.
    wcats, biases = [], []
    for (w, b) in params:
        dl = w.shape[0] // 5
        wcat = jnp.concatenate(
            [w[0 * dl:1 * dl] + w[1 * dl:2 * dl],
             w[2 * dl:3 * dl], w[3 * dl:4 * dl], w[4 * dl:5 * dl]], axis=1)
        wcats.append(wcat.astype(matmul_dtype))            # (D_l, 4*dim_out)
        biases.append(b.astype(jnp.float32))                # (1, dim_out)

    # x is only a matmul operand now (coefficients are applied post-matmul).
    x_in = x.reshape(BT, N, D_in).astype(matmul_dtype)

    in_specs = [
        pl.BlockSpec((3, N, 1), lambda i: (0, 0, 0)),            # resident coeff table
        pl.BlockSpec((bt_tile, N, D_in), lambda i: (i, 0, 0)),   # activation tile
    ]
    operands = [coeff, x_in]
    for wcat, b in zip(wcats, biases):
        in_specs.append(pl.BlockSpec(wcat.shape, lambda i: (0, 0)))   # resident weight
        in_specs.append(pl.BlockSpec(b.shape, lambda i: (0, 0)))      # resident bias
        operands.extend([wcat, b])

    out = pl.pallas_call(
        _fused_rnn_kernel,
        out_shape=jax.ShapeDtypeStruct((BT, N, dim_out), jnp.float32),
        grid_spec=pltpu.PrefetchScalarGridSpec(
            num_scalar_prefetch=0,
            grid=grid,
            in_specs=in_specs,
            out_specs=pl.BlockSpec((bt_tile, N, dim_out), lambda i: (i, 0, 0)),
        ),
        compiler_params=pltpu.CompilerParams(
            dimension_semantics=("parallel",),
            # Per-tile footprint here is well under 1 MiB; 32 MiB is safe on
            # v5e/v6e (128 MiB VMEM) and leaves headroom on v7x (64 MiB).
            vmem_limit_bytes=32 * 1024 * 1024,
        ),
    )(*operands)

    # TODO(synk): F.dropout(p=0.1) runs in training mode in the reference; eval-mode
    # (identity) semantics are used here.
    return out.reshape(B, T, N, dim_out)


def rnn_reference(x, L, params):
    """Plain-JAX reference of the PyTorch forward (eval mode), full-precision matmuls."""
    d = jnp.diagonal(L)[None, None, :, None].astype(jnp.float32)
    cur = x.astype(jnp.float32)
    for (w, b) in params:
        s3 = cur
        s0 = d * cur
        s1 = 2.0 * d * s0 - s3
        s2 = 2.0 * d * s1 - s0
        msg = jnp.concatenate([s0, s0, s1, s2, s3], axis=-1)
        cur = jax.nn.relu(
            jnp.einsum('btnf,fo->btno', msg, w,
                       precision=jax.lax.Precision.HIGHEST) + b[0])
    return cur


def init_params(key, dim_in, dim_out, num_layers):
    # NOTE: the reference nn.Linear declares in_features = dim_in * 4, but its forward
    # concatenates 5 blocks (num_edgetype + polynomial_order + 1); we size the weight
    # to match the actual forward pass (5 * dim_in), otherwise the matmul is undefined.
    dims = [dim_in] + [dim_out] * num_layers
    params = []
    for tt in range(num_layers):
        key, kw, kb = jax.random.split(key, 3)
        fan_in = 5 * dims[tt]
        w = jax.random.uniform(kw, (fan_in, dims[tt + 1]), jnp.float32, -1.0, 1.0)
        w = w / jnp.sqrt(jnp.float32(fan_in))
        b = jax.random.uniform(kb, (1, dims[tt + 1]), jnp.float32, -1.0, 1.0)
        b = b / jnp.sqrt(jnp.float32(fan_in))
        params.append((w, b))
    return params


if __name__ == "__main__":
    B, T, N, D_IN, D_OUT, LAYERS = 2, 4, 16, 8, 32, 2
    key = jax.random.PRNGKey(0)
    kx, kl, kp = jax.random.split(key, 3)
    x = jax.random.normal(kx, (B, T, N, D_IN), jnp.float32)
    # Only diag(L) enters the math; keep it in [-1, 1] like a rescaled graph
    # Laplacian so the Chebyshev terms stay bounded.
    L = jax.random.uniform(kl, (N, N), jnp.float32, -1.0, 1.0)
    params = init_params(kp, D_IN, D_OUT, LAYERS)

    ref = rnn_reference(x, L, params)

    # f32 matmul path: validates the Wcat / coefficient restructuring is exact math.
    out_f32 = jax.block_until_ready(
        rnn_forward(x, L, params, matmul_dtype=jnp.float32))
    assert out_f32.shape == (B, T, N, D_OUT)
    assert jnp.allclose(out_f32, ref, atol=2e-3, rtol=2e-3), \
        float(jnp.max(jnp.abs(out_f32 - ref)))

    # bf16 matmul operands with f32 accumulation: the default (v6e/v7x-friendly) path.
    out_bf16 = jax.block_until_ready(
        rnn_forward(x, L, params, matmul_dtype=jnp.bfloat16))
    assert out_bf16.shape == (B, T, N, D_OUT)
    assert jnp.allclose(out_bf16, ref, atol=5e-2, rtol=5e-2), \
        float(jnp.max(jnp.abs(out_bf16 - ref)))

    print("KERNEL_OK")
</pallas_src>

<mosaic_0001>
module attributes {stable_mosaic.version = 11 : i64} {
  func.func @_fused_rnn_kernel(%arg0: i32, %arg1: memref<3x16x1xf32, #tpu.memory_space<vmem>>, %arg2: memref<4x16x8xf32, #tpu.memory_space<vmem>>, %arg3: memref<8x128xf32, #tpu.memory_space<vmem>>, %arg4: memref<1x32xf32, #tpu.memory_space<vmem>>, %arg5: memref<32x128xf32, #tpu.memory_space<vmem>>, %arg6: memref<1x32xf32, #tpu.memory_space<vmem>>, %arg7: memref<4x16x32xf32, #tpu.memory_space<vmem>>) attributes {dimension_semantics = [#tpu.dimension_semantics<parallel>], iteration_bounds = array<i64: 2>, scalar_prefetch = 0 : i64, scratch_operands = 0 : i64, tpu.core_type = #tpu.core_type<tc>, window_params = [{pipeline_mode = #tpu.pipeline_mode<synchronous>, transform_indices = @transform_0, window_bounds = array<i64: 3, 16, 1>}, {transform_indices = @transform_1, window_bounds = array<i64: 4, 16, 8>}, {pipeline_mode = #tpu.pipeline_mode<synchronous>, transform_indices = @transform_2, window_bounds = array<i64: 8, 128>}, {pipeline_mode = #tpu.pipeline_mode<synchronous>, transform_indices = @transform_3, window_bounds = array<i64: 1, 32>}, {pipeline_mode = #tpu.pipeline_mode<synchronous>, transform_indices = @transform_4, window_bounds = array<i64: 32, 128>}, {pipeline_mode = #tpu.pipeline_mode<synchronous>, transform_indices = @transform_5, window_bounds = array<i64: 1, 32>}, {transform_indices = @transform_6, window_bounds = array<i64: 4, 16, 32>}]} {
    %c0 = arith.constant 0 : index
    %c0_0 = arith.constant 0 : index
    %c0_1 = arith.constant 0 : index
    %0 = vector.load %arg1[%c0, %c0_0, %c0_1] : memref<3x16x1xf32, #tpu.memory_space<vmem>>, vector<3x16x1xf32>
    %1 = vector.extract_strided_slice %0 {offsets = [0, 0, 0], sizes = [1, 16, 1], strides = [1, 1, 1]} : vector<3x16x1xf32> to vector<1x16x1xf32>
    %2 = vector.extract_strided_slice %0 {offsets = [1, 0, 0], sizes = [1, 16, 1], strides = [1, 1, 1]} : vector<3x16x1xf32> to vector<1x16x1xf32>
    %3 = vector.extract_strided_slice %0 {offsets = [2, 0, 0], sizes = [1, 16, 1], strides = [1, 1, 1]} : vector<3x16x1xf32> to vector<1x16x1xf32>
    %c0_2 = arith.constant 0 : index
    %c0_3 = arith.constant 0 : index
    %c0_4 = arith.constant 0 : index
    %4 = vector.load %arg2[%c0_2, %c0_3, %c0_4] : memref<4x16x8xf32, #tpu.memory_space<vmem>>, vector<4x16x8xf32>
    %c0_5 = arith.constant 0 : index
    %c0_6 = arith.constant 0 : index
    %5 = vector.load %arg3[%c0_5, %c0_6] : memref<8x128xf32, #tpu.memory_space<vmem>>, vector<8x128xf32>
    %c0_7 = arith.constant 0 : index
    %c0_8 = arith.constant 0 : index
    %6 = vector.load %arg4[%c0_7, %c0_8] : memref<1x32xf32, #tpu.memory_space<vmem>>, vector<1x32xf32>
    %7 = vector.shape_cast %4 : vector<4x16x8xf32> to vector<64x8xf32>
    %cst = arith.constant dense<0.000000e+00> : vector<64x128xf32>
    %8 = tpu.matmul %7, %5, %cst {dimension_numbers = #tpu.dot_dimension_numbers<[1], [0], [0], [1], [0, 0, 1, 1], [], []>} : vector<64x8xf32>, vector<8x128xf32>, vector<64x128xf32> -> vector<64x128xf32>
    %9 = vector.shape_cast %8 : vector<64x128xf32> to vector<4x16x128xf32>
    %10 = vector.extract_strided_slice %9 {offsets = [0, 0, 0], sizes = [4, 16, 32], strides = [1, 1, 1]} : vector<4x16x128xf32> to vector<4x16x32xf32>
    %11 = vector.broadcast %1 : vector<1x16x1xf32> to vector<4x16x32xf32>
    %12 = arith.mulf %11, %10 : vector<4x16x32xf32>
    %13 = vector.extract_strided_slice %9 {offsets = [0, 0, 32], sizes = [4, 16, 32], strides = [1, 1, 1]} : vector<4x16x128xf32> to vector<4x16x32xf32>
    %14 = vector.broadcast %2 : vector<1x16x1xf32> to vector<4x16x32xf32>
    %15 = arith.mulf %14, %13 : vector<4x16x32xf32>
    %16 = arith.addf %12, %15 : vector<4x16x32xf32>
    %17 = vector.extract_strided_slice %9 {offsets = [0, 0, 64], sizes = [4, 16, 32], strides = [1, 1, 1]} : vector<4x16x128xf32> to vector<4x16x32xf32>
    %18 = vector.broadcast %3 : vector<1x16x1xf32> to vector<4x16x32xf32>
    %19 = arith.mulf %18, %17 : vector<4x16x32xf32>
    %20 = arith.addf %16, %19 : vector<4x16x32xf32>
    %21 = vector.extract_strided_slice %9 {offsets = [0, 0, 96], sizes = [4, 16, 32], strides = [1, 1, 1]} : vector<4x16x128xf32> to vector<4x16x32xf32>
    %22 = arith.addf %20, %21 : vector<4x16x32xf32>
    %23 = vector.shape_cast %6 : vector<1x32xf32> to vector<1x1x32xf32>
    %24 = vector.broadcast %23 : vector<1x1x32xf32> to vector<4x16x32xf32>
    %25 = arith.addf %22, %24 : vector<4x16x32xf32>
    %cst_9 = arith.constant 0.000000e+00 : f32
    %26 = vector.broadcast %cst_9 : f32 to vector<4x16x32xf32>
    %27 = arith.maximumf %25, %26 : vector<4x16x32xf32>
    %c0_10 = arith.constant 0 : index
    %c0_11 = arith.constant 0 : index
    %28 = vector.load %arg5[%c0_10, %c0_11] : memref<32x128xf32, #tpu.memory_space<vmem>>, vector<32x128xf32>
    %c0_12 = arith.constant 0 : index
    %c0_13 = arith.constant 0 : index
    %29 = vector.load %arg6[%c0_12, %c0_13] : memref<1x32xf32, #tpu.memory_space<vmem>>, vector<1x32xf32>
    %30 = vector.shape_cast %27 : vector<4x16x32xf32> to vector<64x32xf32>
    %cst_14 = arith.constant dense<0.000000e+00> : vector<64x128xf32>
    %31 = tpu.matmul %30, %28, %cst_14 {dimension_numbers = #tpu.dot_dimension_numbers<[1], [0], [0], [1], [0, 0, 1, 1], [], []>} : vector<64x32xf32>, vector<32x128xf32>, vector<64x128xf32> -> vector<64x128xf32>
    %32 = vector.shape_cast %31 : vector<64x128xf32> to vector<4x16x128xf32>
    %33 = vector.extract_strided_slice %32 {offsets = [0, 0, 0], sizes = [4, 16, 32], strides = [1, 1, 1]} : vector<4x16x128xf32> to vector<4x16x32xf32>
    %34 = vector.broadcast %1 : vector<1x16x1xf32> to vector<4x16x32xf32>
    %35 = arith.mulf %34, %33 : vector<4x16x32xf32>
    %36 = vector.extract_strided_slice %32 {offsets = [0, 0, 32], sizes = [4, 16, 32], strides = [1, 1, 1]} : vector<4x16x128xf32> to vector<4x16x32xf32>
    %37 = vector.broadcast %2 : vector<1x16x1xf32> to vector<4x16x32xf32>
    %38 = arith.mulf %37, %36 : vector<4x16x32xf32>
    %39 = arith.addf %35, %38 : vector<4x16x32xf32>
    %40 = vector.extract_strided_slice %32 {offsets = [0, 0, 64], sizes = [4, 16, 32], strides = [1, 1, 1]} : vector<4x16x128xf32> to vector<4x16x32xf32>
    %41 = vector.broadcast %3 : vector<1x16x1xf32> to vector<4x16x32xf32>
    %42 = arith.mulf %41, %40 : vector<4x16x32xf32>
    %43 = arith.addf %39, %42 : vector<4x16x32xf32>
    %44 = vector.extract_strided_slice %32 {offsets = [0, 0, 96], sizes = [4, 16, 32], strides = [1, 1, 1]} : vector<4x16x128xf32> to vector<4x16x32xf32>
    %45 = arith.addf %43, %44 : vector<4x16x32xf32>
    %46 = vector.shape_cast %29 : vector<1x32xf32> to vector<1x1x32xf32>
    %47 = vector.broadcast %46 : vector<1x1x32xf32> to vector<4x16x32xf32>
    %48 = arith.addf %45, %47 : vector<4x16x32xf32>
    %cst_15 = arith.constant 0.000000e+00 : f32
    %49 = vector.broadcast %cst_15 : f32 to vector<4x16x32xf32>
    %50 = arith.maximumf %48, %49 : vector<4x16x32xf32>
    %c0_16 = arith.constant 0 : index
    %c0_17 = arith.constant 0 : index
    %c0_18 = arith.constant 0 : index
    %51 = vector.load %arg7[%c0_16, %c0_17, %c0_18] : memref<4x16x32xf32, #tpu.memory_space<vmem>>, vector<4x16x32xf32>
    tpu.vector_store %arg7[%c0_16, %c0_17, %c0_18], %50 {strides = array<i32>} : memref<4x16x32xf32, #tpu.memory_space<vmem>>, vector<4x16x32xf32>,
    return
  }
  func.func @transform_0(%arg0: i32) -> (i32, i32, i32) {
    %c0_i32 = arith.constant 0 : i32
    %c0_i32_0 = arith.constant 0 : i32
    %c0_i32_1 = arith.constant 0 : i32
    %c0_i32_2 = arith.constant 0 : i32
    return %c0_i32, %c0_i32_0, %c0_i32_1 : i32, i32, i32
  }
  func.func @transform_1(%arg0: i32) -> (i32, i32, i32) {
    %c0_i32 = arith.constant 0 : i32
    %c0_i32_0 = arith.constant 0 : i32
    %c0_i32_1 = arith.constant 0 : i32
    return %arg0, %c0_i32, %c0_i32_0 : i32, i32, i32
  }
  func.func @transform_2(%arg0: i32) -> (i32, i32) {
    %c0_i32 = arith.constant 0 : i32
    %c0_i32_0 = arith.constant 0 : i32
    %c0_i32_1 = arith.constant 0 : i32
    return %c0_i32, %c0_i32_0 : i32, i32
  }
  func.func @transform_3(%arg0: i32) -> (i32, i32) {
    %c0_i32 = arith.constant 0 : i32
    %c0_i32_0 = arith.constant 0 : i32
    %c0_i32_1 = arith.constant 0 : i32
    return %c0_i32, %c0_i32_0 : i32, i32
  }
  func.func @transform_4(%arg0: i32) -> (i32, i32) {
    %c0_i32 = arith.constant 0 : i32
    %c0_i32_0 = arith.constant 0 : i32
    %c0_i32_1 = arith.constant 0 : i32
    return %c0_i32, %c0_i32_0 : i32, i32
  }
  func.func @transform_5(%arg0: i32) -> (i32, i32) {
    %c0_i32 = arith.constant 0 : i32
    %c0_i32_0 = arith.constant 0 : i32
    %c0_i32_1 = arith.constant 0 : i32
    return %c0_i32, %c0_i32_0 : i32, i32
  }
  func.func @transform_6(%arg0: i32) -> (i32, i32, i32) {
    %c0_i32 = arith.constant 0 : i32
    %c0_i32_0 = arith.constant 0 : i32
    %c0_i32_1 = arith.constant 0 : i32
    return %arg0, %c0_i32, %c0_i32_0 : i32, i32, i32
  }
}

</mosaic_0001>

<llo_original>
// kernel: tpu_custom_call.1
$region0: #{tpu_custom_call.1}
  #allocation0 [shape = 'u32[]', space=smem, size = 0x4, offset = 0x4, fixed_abs, tag = 'smem constant byte address 0x4 - core index']
  #allocation1 [shape = 'u32[144,128]{1,0:T(1,128)}', space=vmem, size = 0x12000, scoped, tag = 'internal scratch']
  %s0 = inlined_call_operand.vmem [shape: f32[3,16,1], index: 0, kind: input, shape index: {}]
  %s1 = inlined_call_operand.vmem [shape: f32[8,16,8], index: 1, kind: input, shape index: {}]
  %s2 = inlined_call_operand.vmem [shape: f32[8,128], index: 2, kind: input, shape index: {}]
  %s3 = inlined_call_operand.vmem [shape: f32[1,32], index: 3, kind: input, shape index: {}]
  %s4 = inlined_call_operand.vmem [shape: f32[32,128], index: 4, kind: input, shape index: {}]
  %s5 = inlined_call_operand.vmem [shape: f32[1,32], index: 5, kind: input, shape index: {}]
  %s6 = inlined_call_operand.hbm [shape: f32[8,16,32], index: 6, kind: output, shape index: {}]
  %s7 = sld [smem:[#allocation0]]
  $region57: #{tpu_custom_call.1} parent=0
    _
  %s9 = ssub.s32 1, %s7
  %s10 = scalar_select 0, %s9, %s7
  $region1: #{tpu_custom_call.1} parent=0
    #allocation2 [shape = 'u8[65536]{0}', space=vmem, size = 0x10000, scoped, tag = 'output window, operand 0']
    #allocation3 [shape = 's32[2]{0}', space=sflag, size = 0x8, scoped, tag = 'scoped memory for tpu_custom_call.1']
    %11 = vsyncpa [#allocation3], 0
    %s12 = scalar_lea.sflag [#allocation3], 1
    %13 = vsyncpa %s12, 0
    loop: start=0, step=1, limit=4
    $region2: #{tpu_custom_call.1} parent=1 // loop_pre_header
      _
    $region3: #{tpu_custom_call.1} parent=1 // loop_header
      %s15 = sphi 0, %s19
      %p16 = scmp.ge.s32.totalorder %s15, 4
      %s23 = sphi 0, %s23
      %s25 = sphi 0, %s23
      %s26 = sphi 0, %s25
      %s40 = sphi 0, %s26
      %s46 = sphi 0, %s48
      %s49 = sphi 0, %s46
      %s50 = sphi 0, %s49
      %s66 = sphi 0, %s50
      %s70 = sphi 0, %s70
      %s72 = sphi 0, %s70
      %s73 = sphi 0, %s72
      %s87 = sphi 0, %s73
      %s91 = sphi 0, %s91
      %s93 = sphi 0, %s91
      %s94 = sphi 0, %s93
      %s108 = sphi 0, %s94
      %s112 = sphi 0, %s112
      %s114 = sphi 0, %s112
      %s115 = sphi 0, %s114
      %s129 = sphi 0, %s115
      %s133 = sphi 0, %s133
      %s135 = sphi 0, %s133
      %s136 = sphi 0, %s135
      %s150 = sphi 0, %s136
      %s156 = sphi 0, %s158
      %s159 = sphi 0, %s156
      %s160 = sphi 0, %s159
      %s176 = sphi 0, %s160
    $region4: #{tpu_custom_call.1} parent=1 // loop_header_branch
      %18 = sbr.rel (%p16) target = $region8
    $region5: #{tpu_custom_call.1} parent=1 // loop_body
      %s20 = ssub.s32 %s15, 1
      %s21 = ssub.s32 %s15, 2
      %s22 = sadd.s32 %s15, 1
      %s24 = sadd.s32 %s23, 1
      %p27 = scmp.eq.s32.totalorder %s15, 1
      %p28 = scmp.ne.s32.totalorder %s23, %s25
      %p29 = scmp.eq.s32.totalorder %s15, 0
      %p30 = por %p28, %p29
      %p31 = scmp.ne.s32.totalorder %s23, %s25
      %p32 = scmp.eq.s32.totalorder %s20, 1
      %p33 = por %p31, %p32
      %p34 = scmp.ne.s32.totalorder %s25, %s26
      %p35 = scmp.eq.s32.totalorder %s20, 0
      %p36 = por %p34, %p35
      %p37 = scmp.ne.s32.totalorder %s25, %s26
      %p38 = scmp.eq.s32.totalorder %s21, 1
      %p39 = por %p37, %p38
      %p41 = scmp.ne.s32.totalorder %s26, %s40
      %p42 = scmp.eq.s32.totalorder %s21, 0
      %p43 = por %p41, %p42
      %s44 = ssub.s32 %s15, %s22
      %p45 = scmp.eq.s32.totalorder %s44, 0
      %s47 = sadd.s32 %s46, 1
      %s48 = scalar_select %p45, %s46, %s47
      %p51 = pneg %p45
      %p52 = scmp.eq.s32.totalorder %s15, 1
      %p53 = por %p51, %p52
      %p54 = scmp.ne.s32.totalorder %s46, %s49
      %p55 = scmp.eq.s32.totalorder %s15, 0
      %p56 = por %p54, %p55
      %p57 = scmp.ne.s32.totalorder %s46, %s49
      %p58 = scmp.eq.s32.totalorder %s20, 1
      %p59 = por %p57, %p58
      %p60 = scmp.ne.s32.totalorder %s49, %s50
      %p61 = scmp.eq.s32.totalorder %s20, 0
      %p62 = por %p60, %p61
      %p63 = scmp.ne.s32.totalorder %s49, %s50
      %p64 = scmp.eq.s32.totalorder %s21, 1
      %p65 = por %p63, %p64
      %p67 = scmp.ne.s32.totalorder %s50, %s66
      %p68 = scmp.eq.s32.totalorder %s21, 0
      %p69 = por %p67, %p68
      %s71 = sadd.s32 %s70, 1
      %p74 = scmp.eq.s32.totalorder %s15, 1
      %p75 = scmp.ne.s32.totalorder %s70, %s72
      %p76 = scmp.eq.s32.totalorder %s15, 0
      %p77 = por %p75, %p76
      %p78 = scmp.ne.s32.totalorder %s70, %s72
      %p79 = scmp.eq.s32.totalorder %s20, 1
      %p80 = por %p78, %p79
      %p81 = scmp.ne.s32.totalorder %s72, %s73
      %p82 = scmp.eq.s32.totalorder %s20, 0
      %p83 = por %p81, %p82
      %p84 = scmp.ne.s32.totalorder %s72, %s73
      %p85 = scmp.eq.s32.totalorder %s21, 1
      %p86 = por %p84, %p85
      %p88 = scmp.ne.s32.totalorder %s73, %s87
      %p89 = scmp.eq.s32.totalorder %s21, 0
      %p90 = por %p88, %p89
      %s92 = sadd.s32 %s91, 1
      %p95 = scmp.eq.s32.totalorder %s15, 1
      %p96 = scmp.ne.s32.totalorder %s91, %s93
      %p97 = scmp.eq.s32.totalorder %s15, 0
      %p98 = por %p96, %p97
      %p99 = scmp.ne.s32.totalorder %s91, %s93
      %p100 = scmp.eq.s32.totalorder %s20, 1
      %p101 = por %p99, %p100
      %p102 = scmp.ne.s32.totalorder %s93, %s94
      %p103 = scmp.eq.s32.totalorder %s20, 0
      %p104 = por %p102, %p103
      %p105 = scmp.ne.s32.totalorder %s93, %s94
      %p106 = scmp.eq.s32.totalorder %s21, 1
      %p107 = por %p105, %p106
      %p109 = scmp.ne.s32.totalorder %s94, %s108
      %p110 = scmp.eq.s32.totalorder %s21, 0
      %p111 = por %p109, %p110
      %s113 = sadd.s32 %s112, 1
      %p116 = scmp.eq.s32.totalorder %s15, 1
      %p117 = scmp.ne.s32.totalorder %s112, %s114
      %p118 = scmp.eq.s32.totalorder %s15, 0
      %p119 = por %p117, %p118
      %p120 = scmp.ne.s32.totalorder %s112, %s114
      %p121 = scmp.eq.s32.totalorder %s20, 1
      %p122 = por %p120, %p121
      %p123 = scmp.ne.s32.totalorder %s114, %s115
      %p124 = scmp.eq.s32.totalorder %s20, 0
      %p125 = por %p123, %p124
      %p126 = scmp.ne.s32.totalorder %s114, %s115
      %p127 = scmp.eq.s32.totalorder %s21, 1
      %p128 = por %p126, %p127
      %p130 = scmp.ne.s32.totalorder %s115, %s129
      %p131 = scmp.eq.s32.totalorder %s21, 0
      %p132 = por %p130, %p131
      %s134 = sadd.s32 %s133, 1
      %p137 = scmp.eq.s32.totalorder %s15, 1
      %p138 = scmp.ne.s32.totalorder %s133, %s135
      %p139 = scmp.eq.s32.totalorder %s15, 0
      %p140 = por %p138, %p139
      %p141 = scmp.ne.s32.totalorder %s133, %s135
      %p142 = scmp.eq.s32.totalorder %s20, 1
      %p143 = por %p141, %p142
      %p144 = scmp.ne.s32.totalorder %s135, %s136
      %p145 = scmp.eq.s32.totalorder %s20, 0
      %p146 = por %p144, %p145
      %p147 = scmp.ne.s32.totalorder %s135, %s136
      %p148 = scmp.eq.s32.totalorder %s21, 1
      %p149 = por %p147, %p148
      %p151 = scmp.ne.s32.totalorder %s136, %s150
      %p152 = scmp.eq.s32.totalorder %s21, 0
      %p153 = por %p151, %p152
      %s154 = ssub.s32 %s15, %s22
      %p155 = scmp.eq.s32.totalorder %s154, 0
      %s157 = sadd.s32 %s156, 1
      %s158 = scalar_select %p155, %s156, %s157
      %p161 = pneg %p155
      %p162 = scmp.eq.s32.totalorder %s15, 1
      %p163 = por %p161, %p162
      %p164 = scmp.ne.s32.totalorder %s156, %s159
      %p165 = scmp.eq.s32.totalorder %s15, 0
      %p166 = por %p164, %p165
      %p167 = scmp.ne.s32.totalorder %s156, %s159
      %p168 = scmp.eq.s32.totalorder %s20, 1
      %p169 = por %p167, %p168
      %p170 = scmp.ne.s32.totalorder %s159, %s160
      %p171 = scmp.eq.s32.totalorder %s20, 0
      %p172 = por %p170, %p171
      %p173 = scmp.ne.s32.totalorder %s159, %s160
      %p174 = scmp.eq.s32.totalorder %s21, 1
      %p175 = por %p173, %p174
      %p177 = scmp.ne.s32.totalorder %s160, %s176
      %p178 = scmp.eq.s32.totalorder %s21, 0
      %p179 = por %p177, %p178
      %p180 = scmp.le.s32.totalorder 1, %s15
      %p181 = scmp.lt.s32.totalorder %s15, 3
      %p182 = pnand %p180, %p181
      %p183 = pneg %p182
      // Predicated region
      $region9: #{tpu_custom_call.1} parent=5 // pred_check
        _
      $region10: #{tpu_custom_call.1} parent=5 // pred_check_branch
        %185 = sbr.rel (%p182) target = $region12
      $region11: #{tpu_custom_call.1} parent=5 // pred_region
        %s186 = ssub.s32 %s15, 1
        // Predicated region
        $region13: #{tpu_custom_call.1} parent=11 // pred_check
          %p187 = pneg %p36
        $region14: #{tpu_custom_call.1} parent=11 // pred_check_branch
          %189 = sbr.rel (%p187) target = $region16
        $region15: #{tpu_custom_call.1} parent=11 // pred_region
          _
        $region16: #{tpu_custom_call.1} parent=11 // pred_fallthru
          _
        // Predicated region
        $region17: #{tpu_custom_call.1} parent=11 // pred_check
          %p190 = pneg %p83
        $region18: #{tpu_custom_call.1} parent=11 // pred_check_branch
          %192 = sbr.rel (%p190) target = $region20
        $region19: #{tpu_custom_call.1} parent=11 // pred_region
          _
        $region20: #{tpu_custom_call.1} parent=11 // pred_fallthru
          _
        // Predicated region
        $region21: #{tpu_custom_call.1} parent=11 // pred_check
          %p193 = pneg %p104
        $region22: #{tpu_custom_call.1} parent=11 // pred_check_branch
          %195 = sbr.rel (%p193) target = $region24
        $region23: #{tpu_custom_call.1} parent=11 // pred_region
          _
        $region24: #{tpu_custom_call.1} parent=11 // pred_fallthru
          _
        // Predicated region
        $region25: #{tpu_custom_call.1} parent=11 // pred_check
          %p196 = pneg %p125
        $region26: #{tpu_custom_call.1} parent=11 // pred_check_branch
          %198 = sbr.rel (%p196) target = $region28
        $region27: #{tpu_custom_call.1} parent=11 // pred_region
          _
        $region28: #{tpu_custom_call.1} parent=11 // pred_fallthru
          _
        // Predicated region
        $region29: #{tpu_custom_call.1} parent=11 // pred_check
          %p199 = pneg %p146
        $region30: #{tpu_custom_call.1} parent=11 // pred_check_branch
          %201 = sbr.rel (%p199) target = $region32
        $region31: #{tpu_custom_call.1} parent=11 // pred_region
          _
        $region32: #{tpu_custom_call.1} parent=11 // pred_fallthru
          _
      $region12: #{tpu_custom_call.1} parent=5 // pred_fallthru
        _
      %p202 = scmp.lt.s32.totalorder %s15, 2
      // Predicated region
      $region33: #{tpu_custom_call.1} parent=5 // pred_check
        %p203 = pneg %p202
      $region34: #{tpu_custom_call.1} parent=5 // pred_check_branch
        %205 = sbr.rel (%p203) target = $region36
      $region35: #{tpu_custom_call.1} parent=5 // pred_region
        // Predicated region
        $region37: #{tpu_custom_call.1} parent=35 // pred_check
          %p206 = pneg %p56
        $region38: #{tpu_custom_call.1} parent=35 // pred_check_branch
          %208 = sbr.rel (%p206) target = $region40
        $region39: #{tpu_custom_call.1} parent=35 // pred_region
          %s209 = smul.u32 4, %s15
          %p210 = scmp.lt.s32.totalorder %s209, 7
          %s211 = scalar_select %p210, %s209, 7
          %s212 = smul.addr %s211, 2
          %s213 = smul.addr %s212, 8
          %s214 = scalar_lea.vmem %s1, %s213
          %s215 = smul.u32 4, %s15
        $region40: #{tpu_custom_call.1} parent=35 // pred_fallthru
          _
      $region36: #{tpu_custom_call.1} parent=5 // pred_fallthru
        _
      %p216 = scmp.le.s32.totalorder 1, %s15
      %p217 = scmp.lt.s32.totalorder %s15, 3
      %p218 = pnand %p216, %p217
      %p219 = pneg %p218
      // Predicated region
      $region41: #{tpu_custom_call.1} parent=5 // pred_check
        _
      $region42: #{tpu_custom_call.1} parent=5 // pred_check_branch
        %221 = sbr.rel (%p218) target = $region44
      $region43: #{tpu_custom_call.1} parent=5 // pred_region
        %s222 = ssub.s32 %s15, 1
        %p223 = pneg %p36
        %p224 = pneg %p33
        %s225 = smul.u32 4, %s20
        %p226 = scmp.lt.s32.totalorder %s225, 7
        %s227 = scalar_select %p226, %s225, 7
        %s228 = smul.addr %s227, 2
        %s229 = smul.addr %s228, 8
        %s230 = scalar_lea.vmem %s1, %s229
        %p231 = pneg %p62
        %p232 = pneg %p59
        %p233 = pneg %p83
        %p234 = pneg %p80
        %p235 = pneg %p104
        %p236 = pneg %p101
        %p237 = pneg %p125
        %p238 = pneg %p122
        %p239 = pneg %p146
        %p240 = pneg %p143
        %p241 = pneg %p172
        %p242 = pneg %p169
        %s243 = sand.u32 %s159, 1
        %s244 = scalar_lea.sflag [#allocation3], %s243
        %s245 = sand.u32 %s159, 1
        %s246 = smul.addr %s245, 64
        %s247 = scalar_lea.vmem [#allocation2], %s246
        %s248 = smul.u32 4, %s20
        %p249 = scmp.lt.s32.totalorder %s248, 7
        %s250 = scalar_select %p249, %s248, 7
        %s251 = smul.addr %s250, 2
        %s252 = smul.addr %s251, 8
        %s253 = scalar_lea.vmem %s1, %s252
        %s254 = smul.u32 4, %s20
        %s255 = smul.u32 4, %s20
        %v256 = vld [vmem:[%s0] sm:$0xff]
        %v257 = vld [vmem:[%s0 + $0x8] sm:$0xff]
        %v258 = vld [vmem:[%s0 + $0x10] sm:$0xff]
        %v259 = vld [vmem:[%s0 + $0x18] sm:$0xff]
        %v260 = vld [vmem:[%s0 + $0x20] sm:$0xff]
        %v261 = vld [vmem:[%s0 + $0x28] sm:$0xff]
        %v262 = vld [vmem:[%s253] sm:$0xff]
        %v263 = vld [vmem:[%s253 + $0x8] sm:$0xff]
        %v264 = vld [vmem:[%s253 + $0x10] sm:$0xff]
        %v265 = vld [vmem:[%s253 + $0x18] sm:$0xff]
        %v266 = vld [vmem:[%s253 + $0x20] sm:$0xff]
        %v267 = vld [vmem:[%s253 + $0x28] sm:$0xff]
        %v268 = vld [vmem:[%s253 + $0x30] sm:$0xff]
        %v269 = vld [vmem:[%s253 + $0x38] sm:$0xff]
        %v270 = vld [vmem:[%s2] sm:$0xff]
        %v271 = vld [vmem:[%s3] sm:$0x1]
        %vm272 = vcmask 64512
        %v274 = vsel %vm272, %v262, 0
        %v277 = vsel %vm272, %v263, 0
        %v280 = vsel %vm272, %v264, 0
        %v283 = vsel %vm272, %v265, 0
        %v286 = vsel %vm272, %v266, 0
        %v289 = vsel %vm272, %v267, 0
        %v292 = vsel %vm272, %v268, 0
        %v295 = vsel %vm272, %v269, 0
        %297 = vmatprep.subr.mxu0 0.0
        %298 = vmatpush1.msra.mxu0 0.0
        %299 = vmatprep.subr.mxu0 0.0
        %300 = vmatpush1.msra.mxu0 0.0
        %301 = vmatprep.subr.mxu0 0.0
        %302 = vmatpush1.msra.mxu0 0.0
        %303 = vmatprep.subr.mxu0 0.0
        %304 = vmatpush1.msra.mxu0 0.0
        %305 = vmatprep.subr.mxu0 0.0
        %306 = vmatpush1.msra.mxu0 0.0
        %307 = vmatprep.subr.mxu0 0.0
        %308 = vmatpush1.msra.mxu0 0.0
        %309 = vmatprep.subr.mxu0 0.0
        %310 = vmatpush1.msra.mxu0 0.0
        %311 = vmatprep.subr.mxu0 0.0
        %312 = vmatpush1.msra.mxu0 0.0
        %313 = vmatprep.subr.mxu0 0.0
        %314 = vmatpush1.msra.mxu0 0.0
        %315 = vmatprep.subr.mxu0 0.0
        %316 = vmatpush1.msra.mxu0 0.0
        %317 = vmatprep.subr.mxu0 0.0
        %318 = vmatpush1.msra.mxu0 0.0
        %319 = vmatprep.subr.mxu0 0.0
        %320 = vmatpush1.msra.mxu0 0.0
        %321 = vmatprep.subr.mxu0 0.0
        %322 = vmatpush1.msra.mxu0 0.0
        %323 = vmatprep.subr.mxu0 0.0
        %324 = vmatpush1.msra.mxu0 0.0
        %325 = vmatprep.subr.mxu0 0.0
        %326 = vmatpush1.msra.mxu0 0.0
        %327 = vmatprep.subr.mxu0 0.0
        %328 = vmatpush1.msra.mxu0 %v270
        %329 = vmatprep.subr.mxu0 0.0
        %330 = vmatpush2.msra.mxu0 0.0
        %331 = vmatprep.subr.mxu0 0.0
        %332 = vmatpush2.msra.mxu0 0.0
        %333 = vmatprep.subr.mxu0 0.0
        %334 = vmatpush2.msra.mxu0 0.0
        %335 = vmatprep.subr.mxu0 0.0
        %336 = vmatpush2.msra.mxu0 0.0
        %337 = vmatprep.subr.mxu0 0.0
        %338 = vmatpush2.msra.mxu0 0.0
        %339 = vmatprep.subr.mxu0 0.0
        %340 = vmatpush2.msra.mxu0 0.0
        %341 = vmatprep.subr.mxu0 0.0
        %342 = vmatpush2.msra.mxu0 0.0
        %343 = vmatprep.subr.mxu0 0.0
        %344 = vmatpush2.msra.mxu0 0.0
        %345 = vmatprep.subr.mxu0 0.0
        %346 = vmatpush2.msra.mxu0 0.0
        %347 = vmatprep.subr.mxu0 0.0
        %348 = vmatpush2.msra.mxu0 0.0
        %349 = vmatprep.subr.mxu0 0.0
        %350 = vmatpush2.msra.mxu0 0.0
        %351 = vmatprep.subr.mxu0 0.0
        %352 = vmatpush2.msra.mxu0 0.0
        %353 = vmatprep.subr.mxu0 0.0
        %354 = vmatpush2.msra.mxu0 0.0
        %355 = vmatprep.subr.mxu0 0.0
        %356 = vmatpush2.msra.mxu0 0.0
        %357 = vmatprep.subr.mxu0 0.0
        %358 = vmatpush2.msra.mxu0 0.0
        %359 = vmatprep.subr.mxu0 0.0
        %360 = vmatpush2.msra.mxu0 0.0
        %361 = vmatprep.mubr.f32.mxu0 0.0
        %362 = vmatmul.mubr.f32.gmra.mxu0 %v274
        %v363 = vpop.f32.mrf.mxu0
        %v364 = vadd.f32 0.0, %v363
        %v365 = vpop.f32.mrf.mxu0
        %366 = vmatprep.mubr.f32.mxu0 0.0
        %367 = vmatmul.mubr.f32.gmra.mxu0 %v277
        %v368 = vpop.f32.mrf.mxu0
        %v369 = vadd.f32 0.0, %v368
        %v370 = vpop.f32.mrf.mxu0
        %371 = vmatprep.mubr.f32.mxu0 0.0
        %372 = vmatmul.mubr.f32.gmra.mxu0 %v280
        %v373 = vpop.f32.mrf.mxu0
        %v374 = vadd.f32 0.0, %v373
        %v375 = vpop.f32.mrf.mxu0
        %376 = vmatprep.mubr.f32.mxu0 0.0
        %377 = vmatmul.mubr.f32.gmra.mxu0 %v283
        %v378 = vpop.f32.mrf.mxu0
        %v379 = vadd.f32 0.0, %v378
        %v380 = vpop.f32.mrf.mxu0
        %381 = vmatprep.mubr.f32.mxu0 0.0
        %382 = vmatmul.mubr.f32.gmra.mxu0 %v286
        %v383 = vpop.f32.mrf.mxu0
        %v384 = vadd.f32 0.0, %v383
        %v385 = vpop.f32.mrf.mxu0
        %386 = vmatprep.mubr.f32.mxu0 0.0
        %387 = vmatmul.mubr.f32.gmra.mxu0 %v289
        %v388 = vpop.f32.mrf.mxu0
        %v389 = vadd.f32 0.0, %v388
        %v390 = vpop.f32.mrf.mxu0
        %391 = vmatprep.mubr.f32.mxu0 0.0
        %392 = vmatmul.mubr.f32.gmra.mxu0 %v292
        %v393 = vpop.f32.mrf.mxu0
        %v394 = vadd.f32 0.0, %v393
        %v395 = vpop.f32.mrf.mxu0
        %396 = vmatprep.mubr.f32.mxu0 0.0
        %397 = vmatmul.mubr.f32.gmra.mxu0 %v295
        %v398 = vpop.f32.mrf.mxu0
        %v399 = vadd.f32 0.0, %v398
        %v400 = vpop.f32.mrf.mxu0
        %401 = vdwg.mxu0
        %403 = vset.pattern.permute.xlu0 0
        %404 = vperm.xlu0 %403, %v256
        %v405 = vpop.permute.xlu0 %404
        %408 = vset.pattern.permute.xlu0 0
        %409 = vperm.xlu0 %408, %v257
        %v410 = vpop.permute.xlu0 %409
        %v412 = vmul.f32 %v405, %v364
        %v413 = vmul.f32 %v410, %v369
        %v414 = vmul.f32 %v405, %v374
        %v415 = vmul.f32 %v410, %v379
        %v416 = vmul.f32 %v405, %v384
        %v417 = vmul.f32 %v410, %v389
        %v418 = vmul.f32 %v405, %v394
        %v419 = vmul.f32 %v410, %v399
        %421 = vset.pattern.permute.xlu0 0
        %422 = vperm.xlu0 %421, %v258
        %v423 = vpop.permute.xlu0 %422
        %426 = vset.pattern.permute.xlu0 0
        %427 = vperm.xlu0 %426, %v259
        %v428 = vpop.permute.xlu0 %427
        %v430 = vmul.f32 %v423, %v364
        %v431 = vmul.f32 %v428, %v369
        %v432 = vmul.f32 %v423, %v374
        %v433 = vmul.f32 %v428, %v379
        %v434 = vmul.f32 %v423, %v384
        %v435 = vmul.f32 %v428, %v389
        %v436 = vmul.f32 %v423, %v394
        %v437 = vmul.f32 %v428, %v399
        %446 = vrot.lane.b32.xlu0 %v430, 96
        %v447 = vpop.permute.xlu0 %446
        %448 = vrot.lane.b32.xlu0 %v431, 96
        %v449 = vpop.permute.xlu0 %448
        %450 = vrot.lane.b32.xlu0 %v432, 96
        %v451 = vpop.permute.xlu0 %450
        %452 = vrot.lane.b32.xlu0 %v433, 96
        %v453 = vpop.permute.xlu0 %452
        %454 = vrot.lane.b32.xlu0 %v434, 96
        %v455 = vpop.permute.xlu0 %454
        %456 = vrot.lane.b32.xlu0 %v435, 96
        %v457 = vpop.permute.xlu0 %456
        %458 = vrot.lane.b32.xlu0 %v436, 96
        %v459 = vpop.permute.xlu0 %458
        %460 = vrot.lane.b32.xlu0 %v437, 96
        %v461 = vpop.permute.xlu0 %460
        %v470 = vadd.f32 %v412, %v447
        %v471 = vadd.f32 %v413, %v449
        %v472 = vadd.f32 %v414, %v451
        %v473 = vadd.f32 %v415, %v453
        %v474 = vadd.f32 %v416, %v455
        %v475 = vadd.f32 %v417, %v457
        %v476 = vadd.f32 %v418, %v459
        %v477 = vadd.f32 %v419, %v461
        %479 = vset.pattern.permute.xlu0 0
        %480 = vperm.xlu0 %479, %v260
        %v481 = vpop.permute.xlu0 %480
        %484 = vset.pattern.permute.xlu0 0
        %485 = vperm.xlu0 %484, %v261
        %v486 = vpop.permute.xlu0 %485
        %v488 = vmul.f32 %v481, %v364
        %v489 = vmul.f32 %v486, %v369
        %v490 = vmul.f32 %v481, %v374
        %v491 = vmul.f32 %v486, %v379
        %v492 = vmul.f32 %v481, %v384
        %v493 = vmul.f32 %v486, %v389
        %v494 = vmul.f32 %v481, %v394
        %v495 = vmul.f32 %v486, %v399
        %504 = vrot.lane.b32.xlu0 %v488, 64
        %v505 = vpop.permute.xlu0 %504
        %506 = vrot.lane.b32.xlu0 %v489, 64
        %v507 = vpop.permute.xlu0 %506
        %508 = vrot.lane.b32.xlu0 %v490, 64
        %v509 = vpop.permute.xlu0 %508
        %510 = vrot.lane.b32.xlu0 %v491, 64
        %v511 = vpop.permute.xlu0 %510
        %512 = vrot.lane.b32.xlu0 %v492, 64
        %v513 = vpop.permute.xlu0 %512
        %514 = vrot.lane.b32.xlu0 %v493, 64
        %v515 = vpop.permute.xlu0 %514
        %516 = vrot.lane.b32.xlu0 %v494, 64
        %v517 = vpop.permute.xlu0 %516
        %518 = vrot.lane.b32.xlu0 %v495, 64
        %v519 = vpop.permute.xlu0 %518
        %v528 = vadd.f32 %v470, %v505
        %v529 = vadd.f32 %v471, %v507
        %v530 = vadd.f32 %v472, %v509
        %v531 = vadd.f32 %v473, %v511
        %v532 = vadd.f32 %v474, %v513
        %v533 = vadd.f32 %v475, %v515
        %v534 = vadd.f32 %v476, %v517
        %v535 = vadd.f32 %v477, %v519
        %544 = vrot.lane.b32.xlu0 %v364, 32
        %v545 = vpop.permute.xlu0 %544
        %546 = vrot.lane.b32.xlu0 %v369, 32
        %v547 = vpop.permute.xlu0 %546
        %548 = vrot.lane.b32.xlu0 %v374, 32
        %v549 = vpop.permute.xlu0 %548
        %550 = vrot.lane.b32.xlu0 %v379, 32
        %v551 = vpop.permute.xlu0 %550
        %552 = vrot.lane.b32.xlu0 %v384, 32
        %v553 = vpop.permute.xlu0 %552
        %554 = vrot.lane.b32.xlu0 %v389, 32
        %v555 = vpop.permute.xlu0 %554
        %556 = vrot.lane.b32.xlu0 %v394, 32
        %v557 = vpop.permute.xlu0 %556
        %558 = vrot.lane.b32.xlu0 %v399, 32
        %v559 = vpop.permute.xlu0 %558
        %v568 = vadd.f32 %v528, %v545
        %v569 = vadd.f32 %v529, %v547
        %v570 = vadd.f32 %v530, %v549
        %v571 = vadd.f32 %v531, %v551
        %v572 = vadd.f32 %v532, %v553
        %v573 = vadd.f32 %v533, %v555
        %v574 = vadd.f32 %v534, %v557
        %v575 = vadd.f32 %v535, %v559
        %v577 = vlaneseq
        %v578 = vshrl.u32 %v577, 7
        %v579 = vsub.s32 0, %v578
        %v580 = vrot.slane %v271, %v579
        %v582 = vadd.f32 %v568, %v580
        %v583 = vadd.f32 %v569, %v580
        %v584 = vadd.f32 %v570, %v580
        %v585 = vadd.f32 %v571, %v580
        %v586 = vadd.f32 %v572, %v580
        %v587 = vadd.f32 %v573, %v580
        %v588 = vadd.f32 %v574, %v580
        %v589 = vadd.f32 %v575, %v580
        %v590 = vmax.f32 %v582, 0.0
        %v591 = vmax.f32 %v583, 0.0
        %v592 = vmax.f32 %v584, 0.0
        %v593 = vmax.f32 %v585, 0.0
        %v594 = vmax.f32 %v586, 0.0
        %v595 = vmax.f32 %v587, 0.0
        %v596 = vmax.f32 %v588, 0.0
        %v597 = vmax.f32 %v589, 0.0
        %v598 = vld [vmem:[%s4] sm:$0xff]
        %v599 = vld [vmem:[%s4 + $0x8] sm:$0xff]
        %v600 = vld [vmem:[%s4 + $0x10] sm:$0xff]
        %v601 = vld [vmem:[%s4 + $0x18] sm:$0xff]
        %v602 = vld [vmem:[%s5] sm:$0x1]
        %vm603 = vcmask 261120
        %v605 = vsel %vm603, %v590, 0
        %v608 = vsel %vm603, %v591, 0
        %v611 = vsel %vm603, %v592, 0
        %v614 = vsel %vm603, %v593, 0
        %v617 = vsel %vm603, %v594, 0
        %v620 = vsel %vm603, %v595, 0
        %v623 = vsel %vm603, %v596, 0
        %v626 = vsel %vm603, %v597, 0
        %628 = vmatprep.subr.mxu0 0.0
        %629 = vmatpush1.msra.mxu0 0.0
        %630 = vmatprep.subr.mxu0 0.0
        %631 = vmatpush1.msra.mxu0 0.0
        %632 = vmatprep.subr.mxu0 0.0
        %633 = vmatpush1.msra.mxu0 0.0
        %634 = vmatprep.subr.mxu0 0.0
        %635 = vmatpush1.msra.mxu0 0.0
        %636 = vmatprep.subr.mxu0 0.0
        %637 = vmatpush1.msra.mxu0 0.0
        %638 = vmatprep.subr.mxu0 0.0
        %639 = vmatpush1.msra.mxu0 0.0
        %640 = vmatprep.subr.mxu0 0.0
        %641 = vmatpush1.msra.mxu0 0.0
        %642 = vmatprep.subr.mxu0 0.0
        %643 = vmatpush1.msra.mxu0 0.0
        %644 = vmatprep.subr.mxu0 0.0
        %645 = vmatpush1.msra.mxu0 0.0
        %646 = vmatprep.subr.mxu0 0.0
        %647 = vmatpush1.msra.mxu0 0.0
        %648 = vmatprep.subr.mxu0 0.0
        %649 = vmatpush1.msra.mxu0 0.0
        %650 = vmatprep.subr.mxu0 0.0
        %651 = vmatpush1.msra.mxu0 0.0
        %652 = vmatprep.subr.mxu0 0.0
        %653 = vmatpush1.msra.mxu0 %v601
        %654 = vmatprep.subr.mxu0 0.0
        %655 = vmatpush1.msra.mxu0 %v600
        %656 = vmatprep.subr.mxu0 0.0
        %657 = vmatpush1.msra.mxu0 %v599
        %658 = vmatprep.subr.mxu0 0.0
        %659 = vmatpush1.msra.mxu0 %v598
        %660 = vmatprep.subr.mxu0 0.0
        %661 = vmatpush2.msra.mxu0 0.0
        %662 = vmatprep.subr.mxu0 0.0
        %663 = vmatpush2.msra.mxu0 0.0
        %664 = vmatprep.subr.mxu0 0.0
        %665 = vmatpush2.msra.mxu0 0.0
        %666 = vmatprep.subr.mxu0 0.0
        %667 = vmatpush2.msra.mxu0 0.0
        %668 = vmatprep.subr.mxu0 0.0
        %669 = vmatpush2.msra.mxu0 0.0
        %670 = vmatprep.subr.mxu0 0.0
        %671 = vmatpush2.msra.mxu0 0.0
        %672 = vmatprep.subr.mxu0 0.0
        %673 = vmatpush2.msra.mxu0 0.0
        %674 = vmatprep.subr.mxu0 0.0
        %675 = vmatpush2.msra.mxu0 0.0
        %676 = vmatprep.subr.mxu0 0.0
        %677 = vmatpush2.msra.mxu0 0.0
        %678 = vmatprep.subr.mxu0 0.0
        %679 = vmatpush2.msra.mxu0 0.0
        %680 = vmatprep.subr.mxu0 0.0
        %681 = vmatpush2.msra.mxu0 0.0
        %682 = vmatprep.subr.mxu0 0.0
        %683 = vmatpush2.msra.mxu0 0.0
        %684 = vmatprep.subr.mxu0 0.0
        %685 = vmatpush2.msra.mxu0 0.0
        %686 = vmatprep.subr.mxu0 0.0
        %687 = vmatpush2.msra.mxu0 0.0
        %688 = vmatprep.subr.mxu0 0.0
        %689 = vmatpush2.msra.mxu0 0.0
        %690 = vmatprep.subr.mxu0 0.0
        %691 = vmatpush2.msra.mxu0 0.0
        %692 = vmatprep.mubr.f32.mxu0 0.0
        %693 = vmatmul.mubr.f32.gmra.mxu0 %v605
        %v694 = vpop.f32.mrf.mxu0
        %v695 = vadd.f32 0.0, %v694
        %v696 = vpop.f32.mrf.mxu0
        %697 = vmatprep.mubr.f32.mxu0 0.0
        %698 = vmatmul.mubr.f32.gmra.mxu0 %v608
        %v699 = vpop.f32.mrf.mxu0
        %v700 = vadd.f32 0.0, %v699
        %v701 = vpop.f32.mrf.mxu0
        %702 = vmatprep.mubr.f32.mxu0 0.0
        %703 = vmatmul.mubr.f32.gmra.mxu0 %v611
        %v704 = vpop.f32.mrf.mxu0
        %v705 = vadd.f32 0.0, %v704
        %v706 = vpop.f32.mrf.mxu0
        %707 = vmatprep.mubr.f32.mxu0 0.0
        %708 = vmatmul.mubr.f32.gmra.mxu0 %v614
        %v709 = vpop.f32.mrf.mxu0
        %v710 = vadd.f32 0.0, %v709
        %v711 = vpop.f32.mrf.mxu0
        %712 = vmatprep.mubr.f32.mxu0 0.0
        %713 = vmatmul.mubr.f32.gmra.mxu0 %v617
        %v714 = vpop.f32.mrf.mxu0
        %v715 = vadd.f32 0.0, %v714
        %v716 = vpop.f32.mrf.mxu0
        %717 = vmatprep.mubr.f32.mxu0 0.0
        %718 = vmatmul.mubr.f32.gmra.mxu0 %v620
        %v719 = vpop.f32.mrf.mxu0
        %v720 = vadd.f32 0.0, %v719
        %v721 = vpop.f32.mrf.mxu0
        %722 = vmatprep.mubr.f32.mxu0 0.0
        %723 = vmatmul.mubr.f32.gmra.mxu0 %v623
        %v724 = vpop.f32.mrf.mxu0
        %v725 = vadd.f32 0.0, %v724
        %v726 = vpop.f32.mrf.mxu0
        %727 = vmatprep.mubr.f32.mxu0 0.0
        %728 = vmatmul.mubr.f32.gmra.mxu0 %v626
        %v729 = vpop.f32.mrf.mxu0
        %v730 = vadd.f32 0.0, %v729
        %v731 = vpop.f32.mrf.mxu0
        %732 = vdwg.mxu0
        %v733 = vmul.f32 %v405, %v695
        %v734 = vmul.f32 %v410, %v700
        %v735 = vmul.f32 %v405, %v705
        %v736 = vmul.f32 %v410, %v710
        %v737 = vmul.f32 %v405, %v715
        %v738 = vmul.f32 %v410, %v720
        %v739 = vmul.f32 %v405, %v725
        %v740 = vmul.f32 %v410, %v730
        %v741 = vmul.f32 %v423, %v695
        %v742 = vmul.f32 %v428, %v700
        %v743 = vmul.f32 %v423, %v705
        %v744 = vmul.f32 %v428, %v710
        %v745 = vmul.f32 %v423, %v715
        %v746 = vmul.f32 %v428, %v720
        %v747 = vmul.f32 %v423, %v725
        %v748 = vmul.f32 %v428, %v730
        %757 = vrot.lane.b32.xlu0 %v741, 96
        %v758 = vpop.permute.xlu0 %757
        %759 = vrot.lane.b32.xlu0 %v742, 96
        %v760 = vpop.permute.xlu0 %759
        %761 = vrot.lane.b32.xlu0 %v743, 96
        %v762 = vpop.permute.xlu0 %761
        %763 = vrot.lane.b32.xlu0 %v744, 96
        %v764 = vpop.permute.xlu0 %763
        %765 = vrot.lane.b32.xlu0 %v745, 96
        %v766 = vpop.permute.xlu0 %765
        %767 = vrot.lane.b32.xlu0 %v746, 96
        %v768 = vpop.permute.xlu0 %767
        %769 = vrot.lane.b32.xlu0 %v747, 96
        %v770 = vpop.permute.xlu0 %769
        %771 = vrot.lane.b32.xlu0 %v748, 96
        %v772 = vpop.permute.xlu0 %771
        %v781 = vadd.f32 %v733, %v758
        %v782 = vadd.f32 %v734, %v760
        %v783 = vadd.f32 %v735, %v762
        %v784 = vadd.f32 %v736, %v764
        %v785 = vadd.f32 %v737, %v766
        %v786 = vadd.f32 %v738, %v768
        %v787 = vadd.f32 %v739, %v770
        %v788 = vadd.f32 %v740, %v772
        %v789 = vmul.f32 %v481, %v695
        %v790 = vmul.f32 %v486, %v700
        %v791 = vmul.f32 %v481, %v705
        %v792 = vmul.f32 %v486, %v710
        %v793 = vmul.f32 %v481, %v715
        %v794 = vmul.f32 %v486, %v720
        %v795 = vmul.f32 %v481, %v725
        %v796 = vmul.f32 %v486, %v730
        %805 = vrot.lane.b32.xlu0 %v789, 64
        %v806 = vpop.permute.xlu0 %805
        %807 = vrot.lane.b32.xlu0 %v790, 64
        %v808 = vpop.permute.xlu0 %807
        %809 = vrot.lane.b32.xlu0 %v791, 64
        %v810 = vpop.permute.xlu0 %809
        %811 = vrot.lane.b32.xlu0 %v792, 64
        %v812 = vpop.permute.xlu0 %811
        %813 = vrot.lane.b32.xlu0 %v793, 64
        %v814 = vpop.permute.xlu0 %813
        %815 = vrot.lane.b32.xlu0 %v794, 64
        %v816 = vpop.permute.xlu0 %815
        %817 = vrot.lane.b32.xlu0 %v795, 64
        %v818 = vpop.permute.xlu0 %817
        %819 = vrot.lane.b32.xlu0 %v796, 64
        %v820 = vpop.permute.xlu0 %819
        %v829 = vadd.f32 %v781, %v806
        %v830 = vadd.f32 %v782, %v808
        %v831 = vadd.f32 %v783, %v810
        %v832 = vadd.f32 %v784, %v812
        %v833 = vadd.f32 %v785, %v814
        %v834 = vadd.f32 %v786, %v816
        %v835 = vadd.f32 %v787, %v818
        %v836 = vadd.f32 %v788, %v820
        %845 = vrot.lane.b32.xlu0 %v695, 32
        %v846 = vpop.permute.xlu0 %845
        %847 = vrot.lane.b32.xlu0 %v700, 32
        %v848 = vpop.permute.xlu0 %847
        %849 = vrot.lane.b32.xlu0 %v705, 32
        %v850 = vpop.permute.xlu0 %849
        %851 = vrot.lane.b32.xlu0 %v710, 32
        %v852 = vpop.permute.xlu0 %851
        %853 = vrot.lane.b32.xlu0 %v715, 32
        %v854 = vpop.permute.xlu0 %853
        %855 = vrot.lane.b32.xlu0 %v720, 32
        %v856 = vpop.permute.xlu0 %855
        %857 = vrot.lane.b32.xlu0 %v725, 32
        %v858 = vpop.permute.xlu0 %857
        %859 = vrot.lane.b32.xlu0 %v730, 32
        %v860 = vpop.permute.xlu0 %859
        %v869 = vadd.f32 %v829, %v846
        %v870 = vadd.f32 %v830, %v848
        %v871 = vadd.f32 %v831, %v850
        %v872 = vadd.f32 %v832, %v852
        %v873 = vadd.f32 %v833, %v854
        %v874 = vadd.f32 %v834, %v856
        %v875 = vadd.f32 %v835, %v858
        %v876 = vadd.f32 %v836, %v860
        %v878 = vlaneseq
        %v879 = vshrl.u32 %v878, 7
        %v880 = vsub.s32 0, %v879
        %v881 = vrot.slane %v602, %v880
        %v883 = vadd.f32 %v869, %v881
        %v884 = vadd.f32 %v870, %v881
        %v885 = vadd.f32 %v871, %v881
        %v886 = vadd.f32 %v872, %v881
        %v887 = vadd.f32 %v873, %v881
        %v888 = vadd.f32 %v874, %v881
        %v889 = vadd.f32 %v875, %v881
        %v890 = vadd.f32 %v876, %v881
        %v891 = vmax.f32 %v883, 0.0
        %v892 = vmax.f32 %v884, 0.0
        %v893 = vmax.f32 %v885, 0.0
        %v894 = vmax.f32 %v886, 0.0
        %v895 = vmax.f32 %v887, 0.0
        %v896 = vmax.f32 %v888, 0.0
        %v897 = vmax.f32 %v889, 0.0
        %v898 = vmax.f32 %v890, 0.0
        %899 = vst.msk [vmem:[%s247] sm:$0xff] %vm603, %v891
        %900 = vst.msk [vmem:[%s247 + $0x8] sm:$0xff] %vm603, %v892
        %901 = vst.msk [vmem:[%s247 + $0x10] sm:$0xff] %vm603, %v893
        %902 = vst.msk [vmem:[%s247 + $0x18] sm:$0xff] %vm603, %v894
        %903 = vst.msk [vmem:[%s247 + $0x20] sm:$0xff] %vm603, %v895
        %904 = vst.msk [vmem:[%s247 + $0x28] sm:$0xff] %vm603, %v896
        %905 = vst.msk [vmem:[%s247 + $0x30] sm:$0xff] %vm603, %v897
        %906 = vst.msk [vmem:[%s247 + $0x38] sm:$0xff] %vm603, %v898
        %s907 = sand.u32 %s159, 1
        %s908 = scalar_lea.sflag [#allocation3], %s907
        %s909 = sand.u32 %s159, 1
        %s910 = smul.addr %s909, 64
        %s911 = scalar_lea.vmem [#allocation2], %s910
        // Predicated region
        $region45: #{tpu_custom_call.1} parent=43 // pred_check
          %p912 = pneg %p169
        $region46: #{tpu_custom_call.1} parent=43 // pred_check_branch
          %914 = sbr.rel (%p912) target = $region48
        $region47: #{tpu_custom_call.1} parent=43 // pred_region
          %s915 = smul.u32 4, %s20
          %s917 = ssub.s32 1024, 1024
          %918 = vsyncadd %s908, %s917
          %s919 = smul.addr %s915, 2
          %s920 = smul.addr %s919, 128
          %s921 = scalar_lea.hbm %s6, %s920
          %s922 = sshll.u32 %s911, 4
          %s923 = int_to_ptr.vmem [resolvable:$true] %s922
          %928 = dma.vmem_to_hbm [thread:$0]  %s923, 1024, %s921, %s908, 128, 128, 8
        $region48: #{tpu_custom_call.1} parent=43 // pred_fallthru
          _
      $region44: #{tpu_custom_call.1} parent=5 // pred_fallthru
        _
      %p929 = scmp.le.s32.totalorder 2, %s15
      // Predicated region
      $region49: #{tpu_custom_call.1} parent=5 // pred_check
        %p930 = pneg %p929
      $region50: #{tpu_custom_call.1} parent=5 // pred_check_branch
        %932 = sbr.rel (%p930) target = $region52
      $region51: #{tpu_custom_call.1} parent=5 // pred_region
        %s933 = ssub.s32 %s15, 2
        // Predicated region
        $region53: #{tpu_custom_call.1} parent=51 // pred_check
          %p934 = pneg %p175
        $region54: #{tpu_custom_call.1} parent=51 // pred_check_branch
          %936 = sbr.rel (%p934) target = $region56
        $region55: #{tpu_custom_call.1} parent=51 // pred_region
          %s937 = sand.u32 %s160, 1
          %s938 = scalar_lea.sflag [#allocation3], %s937
          %s939 = sand.u32 %s160, 1
          %s940 = smul.addr %s939, 64
          %s941 = scalar_lea.vmem [#allocation2], %s940
          %942 = dma.done %s938, 1024
        $region56: #{tpu_custom_call.1} parent=51 // pred_fallthru
          _
      $region52: #{tpu_custom_call.1} parent=5 // pred_fallthru
        _
    $region6: #{tpu_custom_call.1} parent=1 // loop_footer
      %s19 = sadd.s32 1, %s15
    $region7: #{tpu_custom_call.1} parent=1 // loop_footer_branch
      %14 = sbr.rel target = $region3
    $region8: #{tpu_custom_call.1} parent=1 // loop_exit
      _
    %943 = vsyncpa [#allocation3], 1
    %s944 = scalar_lea.sflag [#allocation3], 1
    %945 = vsyncpa %s944, 1

</llo_original>
